<compile_context>
chip_gen: v6e
topology: v6e:2x2x1
jax: 0.10.0
libtpu: 0.0.40
codegen_flags: <defaults>
</compile_context>

<pallas_src>
import math

import jax
import jax.numpy as jnp
from jax.experimental import pallas as pl
from jax.experimental.pallas import tpu as pltpu


def _round_up(x, m):
    return (x + m - 1) // m * m


def _choose_k_tile(din, tk_target=2048):
    """Pick the Din reduction tile (multiple of 128 when splitting)."""
    if din <= tk_target:
        return din, din                       # single K step, block == full dim
    tk = tk_target
    return tk, _round_up(din, tk)


def _pick_vmem_limit():
    """Per-generation VMEM budget: 3/4 of physical capacity (>= 32 MiB)."""
    try:
        cap = int(pltpu.get_tpu_info().vmem_capacity_bytes)
    except Exception:  # pragma: no cover - conservative fallback (v7x-sized)
        cap = 64 * 1024 * 1024
    return max(32 * 1024 * 1024, cap * 3 // 4)


def _resident_spec(shape, index_map):
    """Constant-index operand: fetched once; request a single pipeline buffer."""
    try:
        return pl.BlockSpec(shape, index_map, pipeline_mode=pl.Buffered(1))
    except Exception:  # older BlockSpec signature: fall back to default buffering
        return pl.BlockSpec(shape, index_map)


# --------------------------------------------------------------------------
# Pallas kernel: fused box-head MLP (fc6 -> relu -> fc7 -> relu -> [cls|bbox])
# Grid = (row tiles, Din tiles). fc6 partial sums accumulate in VMEM f32;
# the rest of the MLP + the lane-dense (tm, 128) store run on the last K step.
# --------------------------------------------------------------------------
def _box_head_kernel(x_ref, w6_ref, b6_ref, w7_ref, b7_ref, wh_ref, bh_ref,
                     out_ref, acc_ref):
    k = pl.program_id(1)

    @pl.when(k == 0)
    def _():
        acc_ref[...] = jnp.zeros_like(acc_ref)

    # fc6 partial sum: bf16 MXU operands, f32 accumulation.
    acc_ref[...] += jnp.dot(x_ref[...], w6_ref[...],
                            preferred_element_type=jnp.float32)

    @pl.when(k == pl.num_programs(1) - 1)
    def _():
        h = jnp.maximum(acc_ref[...] + b6_ref[...], 0.0)              # relu(fc6)
        h = jnp.dot(h.astype(jnp.bfloat16), w7_ref[...],
                    preferred_element_type=jnp.float32) + b7_ref[...]
        h = jnp.maximum(h, 0.0)                                       # relu(fc7)
        # cls|bbox head stays f32 (tiny matmul; avoids bf16 drift on the
        # ~1e-3-magnitude bbox regression weights).
        out_ref[...] = (jnp.dot(h, wh_ref[...],
                                preferred_element_type=jnp.float32)
                        + bh_ref[...])                                # [tm, 128]


def box_head_fused(box_feats, prep, *, tm=512):
    """Run the fused box-head on [n, Din] pooled features. Returns [n, Kp] f32."""
    n, din = box_feats.shape
    assert din == prep["din"]
    din_pad, tk = prep["din_pad"], prep["tk"]
    hid_pad, kp = prep["hid_pad"], prep["kp"]

    # Row tile: multiple of 16 (bf16 sublane packing); give both TensorCores
    # at least one row tile when there are enough proposals (v7x megacore).
    n16 = _round_up(max(n, 1), 16)
    tm_eff = min(tm, n16)
    if n16 > 128 and n16 <= tm_eff:
        tm_eff = _round_up((n16 + 1) // 2, 16)
    n_pad = _round_up(n, tm_eff)

    x = box_feats.astype(jnp.bfloat16)       # no-op when the producer emits bf16
    if n_pad != n or din_pad != din:
        x = jnp.pad(x, ((0, n_pad - n), (0, din_pad - din)))  # zero tail is safe

    grid = (n_pad // tm_eff, din_pad // tk)
    flops = 2 * n_pad * (din_pad * hid_pad + hid_pad * hid_pad + hid_pad * kp)
    bytes_accessed = (x.size * 2 + prep["w6"].size * 2 + prep["w7"].size * 2
                      + (prep["b6"].size + prep["b7"].size) * 4
                      + (prep["wh"].size + prep["bh"].size) * 4
                      + n_pad * kp * 4)

    out = pl.pallas_call(
        _box_head_kernel,
        grid=grid,
        in_specs=[
            pl.BlockSpec((tm_eff, tk), lambda i, k: (i, k)),          # stream x
            pl.BlockSpec((tk, hid_pad), lambda i, k: (k, 0)),         # stream w6 over K
            _resident_spec((1, hid_pad), lambda i, k: (0, 0)),        # b6 resident
            _resident_spec((hid_pad, hid_pad), lambda i, k: (0, 0)),  # w7 resident
            _resident_spec((1, hid_pad), lambda i, k: (0, 0)),        # b7 resident
            _resident_spec((hid_pad, kp), lambda i, k: (0, 0)),       # fused cls|bbox (f32)
            _resident_spec((1, kp), lambda i, k: (0, 0)),             # fused bias
        ],
        out_specs=pl.BlockSpec((tm_eff, kp), lambda i, k: (i, 0)),    # resident over K
        out_shape=jax.ShapeDtypeStruct((n_pad, kp), jnp.float32),
        scratch_shapes=[pltpu.VMEM((tm_eff, hid_pad), jnp.float32)],  # fc6 accumulator
        compiler_params=pltpu.CompilerParams(
            dimension_semantics=("parallel", "arbitrary"),            # rows || , K reduce
            vmem_limit_bytes=_pick_vmem_limit()),
        cost_estimate=pl.CostEstimate(flops=flops, transcendentals=0,
                                      bytes_accessed=bytes_accessed),
    )(x, prep["w6"], prep["b6"], prep["w7"], prep["b7"],
      prep["wh"], prep["bh"])
    return out[:n]


# --------------------------------------------------------------------------
# BoxCoder.decoder (plain JAX; lane-sparse [N,4] work kept out of the kernel).
# Matches the reference: scale_reg = predicts * weights (weights=[.1,.1,.2,.2]).
# --------------------------------------------------------------------------
_BBOX_XFORM_CLIP = math.log(1000.0 / 16.0)   # guard so exp() cannot overflow


def decode_boxes(deltas, anchors, bbox_weights):
    scale = deltas * bbox_weights[None, :]
    a_wh = anchors[:, 2:4] - anchors[:, 0:2]
    a_xy = anchors[:, 0:2] + 0.5 * a_wh
    ctr = a_xy + scale[:, 0:2] * a_wh
    dwh = jnp.minimum(scale[:, 2:4], _BBOX_XFORM_CLIP)
    wh = jnp.exp(dwh) * a_wh
    x1y1 = ctr - 0.5 * wh
    x2y2 = x1y1 + wh
    return jnp.concatenate([x1y1, x2y2], axis=1)


# --------------------------------------------------------------------------
# ROI pooling glue (plain JAX, channels-last, bf16 epilogue).
# TODO(synk): `pooling_layer` is an external undefined module; a single-level
# bilinear RoIAlign stand-in is used. A scalar-prefetched Pallas gather kernel
# could replace this at production sizes.
# --------------------------------------------------------------------------
def roi_align_single(feat_hwc, boxes, out_size, img_w, img_h):
    h, w, c = feat_hwc.shape
    r = out_size
    n = boxes.shape[0]
    sx = w / img_w
    sy = h / img_h
    x1 = boxes[:, 0] * sx
    y1 = boxes[:, 1] * sy
    x2 = boxes[:, 2] * sx
    y2 = boxes[:, 3] * sy
    bw = jnp.maximum(x2 - x1, 1e-6)
    bh = jnp.maximum(y2 - y1, 1e-6)
    grid = (jnp.arange(r, dtype=jnp.float32) + 0.5) / r
    gx = x1[:, None] + bw[:, None] * grid[None, :]                    # [N, R]
    gy = y1[:, None] + bh[:, None] * grid[None, :]                    # [N, R]
    gxx = jnp.broadcast_to(gx[:, None, :], (n, r, r)) - 0.5           # axis1=Ry, axis2=Rx
    gyy = jnp.broadcast_to(gy[:, :, None], (n, r, r)) - 0.5
    x0f = jnp.floor(gxx)
    y0f = jnp.floor(gyy)
    lx = (gxx - x0f)[..., None]
    ly = (gyy - y0f)[..., None]
    x0 = jnp.clip(x0f.astype(jnp.int32), 0, w - 1)
    x1i = jnp.clip(x0f.astype(jnp.int32) + 1, 0, w - 1)
    y0 = jnp.clip(y0f.astype(jnp.int32), 0, h - 1)
    y1i = jnp.clip(y0f.astype(jnp.int32) + 1, 0, h - 1)

    def gather(yi, xi):
        return feat_hwc[yi, xi]                                       # [N, R, R, C] lane-dense

    v00, v01 = gather(y0, x0), gather(y0, x1i)
    v10, v11 = gather(y1i, x0), gather(y1i, x1i)
    out = (v00 * (1 - ly) * (1 - lx) + v01 * (1 - ly) * lx
           + v10 * ly * (1 - lx) + v11 * ly * lx)                     # [N, R, R, C]
    # bf16 cast fused into the gather epilogue; flatten order is (Ry, Rx, C).
    return out.astype(jnp.bfloat16).reshape(n, -1)


# --------------------------------------------------------------------------
# Parameter init (shapes from FasterRCNNSimpleBoxHead.__init__) + prep:
#  bf16 cast of fc weights, hidden/Din zero-padding, cls|bbox fusion (f32),
#  and w6 row permutation to the channels-last ROI-align flatten order.
# --------------------------------------------------------------------------
def init_box_head_params(key, in_dim, hidden, num_cls):
    k6, k6b, k7, k7b, kc, kb = jax.random.split(key, 6)
    b6 = float(in_dim) ** -0.5
    b7 = float(hidden) ** -0.5
    return {
        "w6": jax.random.uniform(k6, (in_dim, hidden), jnp.float32, -b6, b6),
        "b6": jax.random.uniform(k6b, (1, hidden), jnp.float32, -b6, b6),
        "w7": jax.random.uniform(k7, (hidden, hidden), jnp.float32, -b7, b7),
        "b7": jax.random.uniform(k7b, (1, hidden), jnp.float32, -b7, b7),
        "wc": 0.01 * jax.random.normal(kc, (hidden, num_cls + 1), jnp.float32),  # normal_(0, 0.01)
        "bc": jnp.zeros((1, num_cls + 1), jnp.float32),                          # constant_(0)
        "wb": 0.001 * jax.random.normal(kb, (hidden, 4), jnp.float32),           # normal_(0, 0.001)
        "bb": jnp.zeros((1, 4), jnp.float32),                                    # constant_(0)
    }


def prepare_stage_params(params, bbox_weights, in_channels, roi_resolution,
                         tk_target=2048):
    din, hid = params["w6"].shape
    c, r = in_channels, roi_resolution
    assert din == c * r * r
    num_cls_out = params["wc"].shape[1]
    k_total = num_cls_out + 4
    kp = _round_up(max(k_total, 128), 128)           # lane-dense output width
    hid_pad = _round_up(hid, 128)                    # lane-dense hidden width
    tk, din_pad = _choose_k_tile(din, tk_target)

    # Permute w6 rows from PyTorch NCHW flatten order (C, Ry, Rx) to the
    # channels-last ROI-align flatten order (Ry, Rx, C): bit-identical result.
    w6 = params["w6"].reshape(c, r, r, hid).transpose(1, 2, 0, 3).reshape(din, hid)
    w6 = jnp.pad(w6, ((0, din_pad - din), (0, hid_pad - hid)))
    b6 = jnp.pad(params["b6"], ((0, 0), (0, hid_pad - hid)))
    w7 = jnp.pad(params["w7"], ((0, hid_pad - hid), (0, hid_pad - hid)))
    b7 = jnp.pad(params["b7"], ((0, 0), (0, hid_pad - hid)))
    w_head = jnp.concatenate([params["wc"], params["wb"]], axis=1)    # [hid, cls|bbox]
    b_head = jnp.concatenate([params["bc"], params["bb"]], axis=1)
    w_head = jnp.pad(w_head, ((0, hid_pad - hid), (0, kp - k_total)))
    b_head = jnp.pad(b_head, ((0, 0), (0, kp - k_total)))
    return {
        "w6": w6.astype(jnp.bfloat16),
        "b6": b6.astype(jnp.float32),
        "w7": w7.astype(jnp.bfloat16),
        "b7": b7.astype(jnp.float32),
        "wh": w_head.astype(jnp.float32),            # f32: protects tiny bbox weights
        "bh": b_head.astype(jnp.float32),
        "bbox_weights": jnp.asarray(bbox_weights, jnp.float32).reshape(4),
        "num_cls_out": num_cls_out,
        "din": din, "din_pad": din_pad, "tk": tk,
        "hid_pad": hid_pad, "kp": kp,
    }


# --------------------------------------------------------------------------
# CascadeHead forward (eval mode; training losses not implemented)
# --------------------------------------------------------------------------
def cascade_head_forward(feature_map, boxes, valid_size, stage_params_prep,
                         roi_resolution):
    # feature_map: [B, C, Hf, Wf] NCHW; boxes: [B, N, 4]; valid_size: [(w, h), ...]
    b_sz, n, _ = boxes.shape
    num_stages = len(stage_params_prep)

    feat_nhwc = jnp.transpose(feature_map, (0, 2, 3, 1))   # channels-last, once
    img_w = jnp.asarray([s[0] for s in valid_size], jnp.float32)
    img_h = jnp.asarray([s[1] for s in valid_size], jnp.float32)
    roi_align_b = jax.vmap(
        lambda f, b, iw, ih: roi_align_single(f, b, roi_resolution, iw, ih))

    prob_sum = None
    for prep in stage_params_prep:                          # cascade stages (eval path)
        pooled = roi_align_b(feat_nhwc, boxes, img_w, img_h)          # [B, N, R*R*C] bf16
        box_feats = pooled.reshape(b_sz * n, -1)
        out = box_head_fused(box_feats, prep)                         # [B*N, 128] f32
        k = prep["num_cls_out"]
        cls_logits = out[:, :k]                                       # [B*N, num_cls+1]
        deltas = out[:, k:k + 4]
        anchors = boxes.reshape(-1, 4)
        decoded = decode_boxes(deltas, anchors, prep["bbox_weights"]) # BoxCoder.decoder
        boxes = decoded.reshape(b_sz, n, 4)                           # refined -> next stage
        # reference ROIHead does not clip proposals to image bounds; RoIAlign clamps indices.
        probs = jax.nn.softmax(cls_logits, axis=-1)
        prob_sum = probs if prob_sum is None else prob_sum + probs
    cls_mean = prob_sum / float(num_stages)                           # mean over stages
    out_boxes = [boxes[b] for b in range(b_sz)]
    out_cls = [cls_mean[b * n:(b + 1) * n] for b in range(b_sz)]
    return out_boxes, out_cls, {}                                     # loss_sum empty in eval
    # TODO(synk): training path (Matcher / BalancedSampler / CE / IoU loss) is
    # data-dependent (nonzero, randperm) and not implemented as a Pallas kernel.


if __name__ == "__main__":
    key = jax.random.PRNGKey(0)
    B, C, Hf, Wf = 2, 4, 16, 16        # feature map (NCHW)
    N = 8                              # proposals per image
    R = 4                              # roi_resolution  -> head_in = C*R*R = 64
    num_cls = 1
    fc_out_channels = 32
    num_stages = 3
    head_in = C * R * R

    kf, kb1, kb2, kpar = jax.random.split(key, 4)
    feature_map = jax.random.normal(kf, (B, C, Hf, Wf), jnp.float32)
    img_w, img_h = 64.0, 64.0
    xy = jax.random.uniform(kb1, (B, N, 2), jnp.float32, 0.0, img_w - 17.0)
    wh = jax.random.uniform(kb2, (B, N, 2), jnp.float32, 8.0, 16.0)
    boxes = jnp.concatenate([xy, xy + wh], axis=-1)                   # [B, N, 4]
    valid_size = [(img_w, img_h)] * B

    bbox_weights = jnp.array([0.1, 0.1, 0.2, 0.2], jnp.float32)       # BoxCoder default
    pkeys = jax.random.split(kpar, num_stages)
    stage_params_prep = [
        prepare_stage_params(
            init_box_head_params(pkeys[i], head_in, fc_out_channels, num_cls),
            bbox_weights, C, R)
        for i in range(num_stages)
    ]

    fwd = jax.jit(lambda fm, bx: cascade_head_forward(
        fm, bx, valid_size, stage_params_prep, R))
    out_boxes, out_cls, loss_sum = fwd(feature_map, boxes)

    for a in out_boxes + out_cls:
        jax.block_until_ready(a)
    assert out_boxes[0].shape == (N, 4) and out_cls[0].shape == (N, num_cls + 1)
    assert all(bool(jnp.all(jnp.isfinite(a))) for a in out_boxes + out_cls)
    print("KERNEL_OK")
</pallas_src>

<mosaic_0001>
module attributes {stable_mosaic.version = 11 : i64} {
  func.func @_box_head_kernel(%arg0: i32, %arg1: i32, %arg2: memref<16x64xbf16, #tpu.memory_space<vmem>>, %arg3: memref<64x128xbf16, #tpu.memory_space<vmem>>, %arg4: memref<1x128xf32, #tpu.memory_space<vmem>>, %arg5: memref<128x128xbf16, #tpu.memory_space<vmem>>, %arg6: memref<1x128xf32, #tpu.memory_space<vmem>>, %arg7: memref<128x128xf32, #tpu.memory_space<vmem>>, %arg8: memref<1x128xf32, #tpu.memory_space<vmem>>, %arg9: memref<16x128xf32, #tpu.memory_space<vmem>>, %arg10: memref<16x128xf32, #tpu.memory_space<vmem>>) attributes {dimension_semantics = [#tpu.dimension_semantics<parallel>, #tpu.dimension_semantics<arbitrary>], iteration_bounds = array<i64: 1, 1>, scalar_prefetch = 0 : i64, scratch_operands = 1 : i64, tpu.core_type = #tpu.core_type<tc>, window_params = [{transform_indices = @transform_0, window_bounds = array<i64: 16, 64>}, {transform_indices = @transform_1, window_bounds = array<i64: 64, 128>}, {pipeline_mode = #tpu.pipeline_mode<synchronous>, transform_indices = @transform_2, window_bounds = array<i64: 1, 128>}, {pipeline_mode = #tpu.pipeline_mode<synchronous>, transform_indices = @transform_3, window_bounds = array<i64: 128, 128>}, {pipeline_mode = #tpu.pipeline_mode<synchronous>, transform_indices = @transform_4, window_bounds = array<i64: 1, 128>}, {pipeline_mode = #tpu.pipeline_mode<synchronous>, transform_indices = @transform_5, window_bounds = array<i64: 128, 128>}, {pipeline_mode = #tpu.pipeline_mode<synchronous>, transform_indices = @transform_6, window_bounds = array<i64: 1, 128>}, {transform_indices = @transform_7, window_bounds = array<i64: 16, 128>}]} {
    %c0_i32 = arith.constant 0 : i32
    %0 = arith.cmpi eq, %arg1, %c0_i32 : i32
    %1 = arith.extui %0 : i1 to i32
    %c0_i32_0 = arith.constant 0 : i32
    %2 = arith.cmpi ne, %1, %c0_i32_0 : i32
    scf.if %2 {
      %cst_10 = arith.constant 0.000000e+00 : f32
      %12 = vector.broadcast %cst_10 : f32 to vector<16x128xf32>
      %c0_11 = arith.constant 0 : index
      %c0_12 = arith.constant 0 : index
      %13 = vector.load %arg10[%c0_11, %c0_12] : memref<16x128xf32, #tpu.memory_space<vmem>>, vector<16x128xf32>
      tpu.vector_store %arg10[%c0_11, %c0_12], %12 {strides = array<i32>} : memref<16x128xf32, #tpu.memory_space<vmem>>, vector<16x128xf32>,
    } else {
    }
    %c0 = arith.constant 0 : index
    %c0_1 = arith.constant 0 : index
    %3 = vector.load %arg10[%c0, %c0_1] : memref<16x128xf32, #tpu.memory_space<vmem>>, vector<16x128xf32>
    %c0_2 = arith.constant 0 : index
    %c0_3 = arith.constant 0 : index
    %4 = vector.load %arg2[%c0_2, %c0_3] : memref<16x64xbf16, #tpu.memory_space<vmem>>, vector<16x64xbf16>
    %c0_4 = arith.constant 0 : index
    %c0_5 = arith.constant 0 : index
    %5 = vector.load %arg3[%c0_4, %c0_5] : memref<64x128xbf16, #tpu.memory_space<vmem>>, vector<64x128xbf16>
    %cst = arith.constant dense<0.000000e+00> : vector<16x128xf32>
    %6 = tpu.matmul %4, %5, %cst {dimension_numbers = #tpu.dot_dimension_numbers<[1], [0], [0], [1], [0, 0, 1, 1], [], []>} : vector<16x64xbf16>, vector<64x128xbf16>, vector<16x128xf32> -> vector<16x128xf32>
    %7 = arith.addf %3, %6 : vector<16x128xf32>
    %c0_6 = arith.constant 0 : index
    %c0_7 = arith.constant 0 : index
    %8 = vector.load %arg10[%c0_6, %c0_7] : memref<16x128xf32, #tpu.memory_space<vmem>>, vector<16x128xf32>
    tpu.vector_store %arg10[%c0_6, %c0_7], %7 {strides = array<i32>} : memref<16x128xf32, #tpu.memory_space<vmem>>, vector<16x128xf32>,
    %c0_i32_8 = arith.constant 0 : i32
    %9 = arith.cmpi eq, %arg1, %c0_i32_8 : i32
    %10 = arith.extui %9 : i1 to i32
    %c0_i32_9 = arith.constant 0 : i32
    %11 = arith.cmpi ne, %10, %c0_i32_9 : i32
    scf.if %11 {
      %c0_10 = arith.constant 0 : index
      %c0_11 = arith.constant 0 : index
      %12 = vector.load %arg10[%c0_10, %c0_11] : memref<16x128xf32, #tpu.memory_space<vmem>>, vector<16x128xf32>
      %c0_12 = arith.constant 0 : index
      %c0_13 = arith.constant 0 : index
      %13 = vector.load %arg4[%c0_12, %c0_13] : memref<1x128xf32, #tpu.memory_space<vmem>>, vector<1x128xf32>
      %14 = vector.broadcast %13 : vector<1x128xf32> to vector<16x128xf32>
      %15 = arith.addf %12, %14 : vector<16x128xf32>
      %cst_14 = arith.constant 0.000000e+00 : f32
      %16 = vector.broadcast %cst_14 : f32 to vector<16x128xf32>
      %17 = arith.maximumf %15, %16 : vector<16x128xf32>
      %18 = arith.truncf %17 : vector<16x128xf32> to vector<16x128xbf16>
      %c0_15 = arith.constant 0 : index
      %c0_16 = arith.constant 0 : index
      %19 = vector.load %arg5[%c0_15, %c0_16] : memref<128x128xbf16, #tpu.memory_space<vmem>>, vector<128x128xbf16>
      %cst_17 = arith.constant dense<0.000000e+00> : vector<16x128xf32>
      %20 = tpu.matmul %18, %19, %cst_17 {dimension_numbers = #tpu.dot_dimension_numbers<[1], [0], [0], [1], [0, 0, 1, 1], [], []>} : vector<16x128xbf16>, vector<128x128xbf16>, vector<16x128xf32> -> vector<16x128xf32>
      %c0_18 = arith.constant 0 : index
      %c0_19 = arith.constant 0 : index
      %21 = vector.load %arg6[%c0_18, %c0_19] : memref<1x128xf32, #tpu.memory_space<vmem>>, vector<1x128xf32>
      %22 = vector.broadcast %21 : vector<1x128xf32> to vector<16x128xf32>
      %23 = arith.addf %20, %22 : vector<16x128xf32>
      %cst_20 = arith.constant 0.000000e+00 : f32
      %24 = vector.broadcast %cst_20 : f32 to vector<16x128xf32>
      %25 = arith.maximumf %23, %24 : vector<16x128xf32>
      %c0_21 = arith.constant 0 : index
      %c0_22 = arith.constant 0 : index
      %26 = vector.load %arg7[%c0_21, %c0_22] : memref<128x128xf32, #tpu.memory_space<vmem>>, vector<128x128xf32>
      %cst_23 = arith.constant dense<0.000000e+00> : vector<16x128xf32>
      %27 = tpu.matmul %25, %26, %cst_23 {dimension_numbers = #tpu.dot_dimension_numbers<[1], [0], [0], [1], [0, 0, 1, 1], [], []>} : vector<16x128xf32>, vector<128x128xf32>, vector<16x128xf32> -> vector<16x128xf32>
      %c0_24 = arith.constant 0 : index
      %c0_25 = arith.constant 0 : index
      %28 = vector.load %arg8[%c0_24, %c0_25] : memref<1x128xf32, #tpu.memory_space<vmem>>, vector<1x128xf32>
      %29 = vector.broadcast %28 : vector<1x128xf32> to vector<16x128xf32>
      %30 = arith.addf %27, %29 : vector<16x128xf32>
      %c0_26 = arith.constant 0 : index
      %c0_27 = arith.constant 0 : index
      %31 = vector.load %arg9[%c0_26, %c0_27] : memref<16x128xf32, #tpu.memory_space<vmem>>, vector<16x128xf32>
      tpu.vector_store %arg9[%c0_26, %c0_27], %30 {strides = array<i32>} : memref<16x128xf32, #tpu.memory_space<vmem>>, vector<16x128xf32>,
    } else {
    }
    return
  }
  func.func @transform_0(%arg0: i32, %arg1: i32) -> (i32, i32) {
    %c0_i32 = arith.constant 0 : i32
    return %arg0, %arg1 : i32, i32
  }
  func.func @transform_1(%arg0: i32, %arg1: i32) -> (i32, i32) {
    %c0_i32 = arith.constant 0 : i32
    %c0_i32_0 = arith.constant 0 : i32
    return %arg1, %c0_i32 : i32, i32
  }
  func.func @transform_2(%arg0: i32, %arg1: i32) -> (i32, i32) {
    %c0_i32 = arith.constant 0 : i32
    %c0_i32_0 = arith.constant 0 : i32
    %c0_i32_1 = arith.constant 0 : i32
    return %c0_i32, %c0_i32_0 : i32, i32
  }
  func.func @transform_3(%arg0: i32, %arg1: i32) -> (i32, i32) {
    %c0_i32 = arith.constant 0 : i32
    %c0_i32_0 = arith.constant 0 : i32
    %c0_i32_1 = arith.constant 0 : i32
    return %c0_i32, %c0_i32_0 : i32, i32
  }
  func.func @transform_4(%arg0: i32, %arg1: i32) -> (i32, i32) {
    %c0_i32 = arith.constant 0 : i32
    %c0_i32_0 = arith.constant 0 : i32
    %c0_i32_1 = arith.constant 0 : i32
    return %c0_i32, %c0_i32_0 : i32, i32
  }
  func.func @transform_5(%arg0: i32, %arg1: i32) -> (i32, i32) {
    %c0_i32 = arith.constant 0 : i32
    %c0_i32_0 = arith.constant 0 : i32
    %c0_i32_1 = arith.constant 0 : i32
    return %c0_i32, %c0_i32_0 : i32, i32
  }
  func.func @transform_6(%arg0: i32, %arg1: i32) -> (i32, i32) {
    %c0_i32 = arith.constant 0 : i32
    %c0_i32_0 = arith.constant 0 : i32
    %c0_i32_1 = arith.constant 0 : i32
    return %c0_i32, %c0_i32_0 : i32, i32
  }
  func.func @transform_7(%arg0: i32, %arg1: i32) -> (i32, i32) {
    %c0_i32 = arith.constant 0 : i32
    %c0_i32_0 = arith.constant 0 : i32
    return %arg0, %c0_i32 : i32, i32
  }
}

</mosaic_0001>

<llo_original>
// kernel: _lambda_.3
$region0: #{_lambda_.3}
  #allocation0 [shape = 'u32[]', space=smem, size = 0x4, offset = 0x4, fixed_abs, tag = 'smem constant byte address 0x4 - core index']
  #allocation1 [shape = 'u32[144,128]{1,0:T(1,128)}', space=vmem, size = 0x12000, scoped, tag = 'internal scratch']
  #allocation2 [shape = 'f32[16,128]{1,0:T(8,128)}', space=vmem, size = 0x2000, scoped, tag = 'scratch operand']
  %s0 = inlined_call_operand.vmem [shape: bf16[16,64], index: 0, kind: input, shape index: {}]
  %s1 = inlined_call_operand.vmem [shape: bf16[64,128], index: 1, kind: input, shape index: {}]
  %s2 = inlined_call_operand.vmem [shape: f32[1,128], index: 2, kind: input, shape index: {}]
  %s3 = inlined_call_operand.vmem [shape: bf16[128,128], index: 3, kind: input, shape index: {}]
  %s4 = inlined_call_operand.vmem [shape: f32[1,128], index: 4, kind: input, shape index: {}]
  %s5 = inlined_call_operand.vmem [shape: f32[128,128], index: 5, kind: input, shape index: {}]
  %s6 = inlined_call_operand.vmem [shape: f32[1,128], index: 6, kind: input, shape index: {}]
  %s7 = inlined_call_operand.vmem [shape: f32[16,128], index: 7, kind: output, shape index: {}]
  %s8 = sld [smem:[#allocation0]]
  $region46: #{_lambda_.3} parent=0
    _
  %s10 = ssub.s32 1, %s8
  %s11 = scalar_select 0, %s10, %s8
  // Predicated region
  $region2: #{_lambda_.3} parent=0 // pred_check
    _
  $region3: #{_lambda_.3} parent=0 // pred_check_branch
    %13 = sbr.rel (0) target = $region5
  $region4: #{_lambda_.3} parent=0 // pred_region
    _
  $region5: #{_lambda_.3} parent=0 // pred_fallthru
    _
  // Predicated region
  $region6: #{_lambda_.3} parent=0 // pred_check
    _
  $region7: #{_lambda_.3} parent=0 // pred_check_branch
    %15 = sbr.rel (0) target = $region9
  $region8: #{_lambda_.3} parent=0 // pred_region
    _
  $region9: #{_lambda_.3} parent=0 // pred_fallthru
    _
  // Predicated region
  $region10: #{_lambda_.3} parent=0 // pred_check
    _
  $region11: #{_lambda_.3} parent=0 // pred_check_branch
    %17 = sbr.rel (0) target = $region13
  $region12: #{_lambda_.3} parent=0 // pred_region
    _
  $region13: #{_lambda_.3} parent=0 // pred_fallthru
    _
  // Predicated region
  $region14: #{_lambda_.3} parent=0 // pred_check
    _
  $region15: #{_lambda_.3} parent=0 // pred_check_branch
    %19 = sbr.rel (0) target = $region17
  $region16: #{_lambda_.3} parent=0 // pred_region
    _
  $region17: #{_lambda_.3} parent=0 // pred_fallthru
    _
  // Predicated region
  $region18: #{_lambda_.3} parent=0 // pred_check
    _
  $region19: #{_lambda_.3} parent=0 // pred_check_branch
    %21 = sbr.rel (0) target = $region21
  $region20: #{_lambda_.3} parent=0 // pred_region
    _
  $region21: #{_lambda_.3} parent=0 // pred_fallthru
    _
  // Predicated region
  $region22: #{_lambda_.3} parent=0 // pred_check
    _
  $region23: #{_lambda_.3} parent=0 // pred_check_branch
    %23 = sbr.rel (0) target = $region25
  $region24: #{_lambda_.3} parent=0 // pred_region
    _
  $region25: #{_lambda_.3} parent=0 // pred_fallthru
    _
  // Predicated region
  $region26: #{_lambda_.3} parent=0 // pred_check
    _
  $region27: #{_lambda_.3} parent=0 // pred_check_branch
    %25 = sbr.rel (0) target = $region29
  $region28: #{_lambda_.3} parent=0 // pred_region
    _
  $region29: #{_lambda_.3} parent=0 // pred_fallthru
    _
  %p27 = scmp.eq.s32.totalorder 0, 0
  // Predicated region
  $region30: #{_lambda_.3} parent=0 // pred_check
    %p28 = pneg %p27
  $region31: #{_lambda_.3} parent=0 // pred_check_branch
    %30 = sbr.rel (%p28) target = $region33
  $region32: #{_lambda_.3} parent=0 // pred_region
    %31 = vst [vmem:[#allocation2] sm:$0xff] 0.0
    %32 = vst [vmem:[#allocation2 + $0x8] sm:$0xff] 0.0
  $region33: #{_lambda_.3} parent=0 // pred_fallthru
    _
  %v33 = vld [vmem:[#allocation2] sm:$0xff]
  %v34 = vld [vmem:[#allocation2 + $0x8] sm:$0xff]
  %v35 = vld [vmem:[%s0] sm:$0xf]
  %v36 = vld [vmem:[%s0 + $0x4] sm:$0xf]
  %v37 = vld [vmem:[%s1] sm:$0xf]
  %v38 = vld [vmem:[%s1 + $0x4] sm:$0xf]
  %v39 = vld [vmem:[%s1 + $0x8] sm:$0xf]
  %v40 = vld [vmem:[%s1 + $0xc] sm:$0xf]
  %v41 = vld [vmem:[%s1 + $0x10] sm:$0xf]
  %v42 = vld [vmem:[%s1 + $0x14] sm:$0xf]
  %v43 = vld [vmem:[%s1 + $0x18] sm:$0xf]
  %v44 = vld [vmem:[%s1 + $0x1c] sm:$0xf]
  %v47 = vunpack.c.l.b16 %v35
  %v48 = vunpack.c.l.b16 %v36
  %v49 = vpack.c.b16 %v48, %v47
  %v58 = vunpack.c.l.b16 %v37
  %v59 = vunpack.c.l.b16 %v38
  %v60 = vunpack.c.l.b16 %v39
  %v61 = vunpack.c.l.b16 %v40
  %v62 = vunpack.c.l.b16 %v41
  %v63 = vunpack.c.l.b16 %v42
  %v64 = vunpack.c.l.b16 %v43
  %v65 = vunpack.c.l.b16 %v44
  %v66 = vpack.c.b16 %v59, %v58
  %v67 = vpack.c.b16 %v61, %v60
  %v68 = vpack.c.b16 %v63, %v62
  %v69 = vpack.c.b16 %v65, %v64
  %vm74 = vcmask 523264
  %v76 = vsel %vm74, %v49, 0
  %78 = vmatprep.subr.bf16.mxu0 0
  %79 = vmatpush1.bf16.msra.mxu0 0
  %80 = vmatprep.subr.bf16.mxu0 0
  %81 = vmatpush1.bf16.msra.mxu0 0
  %82 = vmatprep.subr.bf16.mxu0 0
  %83 = vmatpush1.bf16.msra.mxu0 0
  %84 = vmatprep.subr.bf16.mxu0 0
  %85 = vmatpush1.bf16.msra.mxu0 0
  %86 = vmatprep.subr.bf16.mxu0 0
  %87 = vmatpush1.bf16.msra.mxu0 %v69
  %88 = vmatprep.subr.bf16.mxu0 0
  %89 = vmatpush1.bf16.msra.mxu0 %v68
  %90 = vmatprep.subr.bf16.mxu0 0
  %91 = vmatpush1.bf16.msra.mxu0 %v67
  %92 = vmatprep.subr.bf16.mxu0 0
  %93 = vmatpush1.bf16.msra.mxu0 %v66
  %94 = vmatprep.subr.bf16.mxu0 0
  %95 = vmatpush2.bf16.msra.mxu0 0
  %96 = vmatprep.subr.bf16.mxu0 0
  %97 = vmatpush2.bf16.msra.mxu0 0
  %98 = vmatprep.subr.bf16.mxu0 0
  %99 = vmatpush2.bf16.msra.mxu0 0
  %100 = vmatprep.subr.bf16.mxu0 0
  %101 = vmatpush2.bf16.msra.mxu0 0
  %102 = vmatprep.subr.bf16.mxu0 0
  %103 = vmatpush2.bf16.msra.mxu0 0
  %104 = vmatprep.subr.bf16.mxu0 0
  %105 = vmatpush2.bf16.msra.mxu0 0
  %106 = vmatprep.subr.bf16.mxu0 0
  %107 = vmatpush2.bf16.msra.mxu0 0
  %108 = vmatprep.subr.bf16.mxu0 0
  %109 = vmatpush2.bf16.msra.mxu0 0
  %110 = vmatprep.mubr.bf16.mxu0 0
  %111 = vmatmul.mubr.bf16.gmra.mxu0 %v76
  %v112 = vpop.f32.mrf.mxu0
  %v113 = vadd.f32 0.0, %v112
  %v114 = vpop.f32.mrf.mxu0
  %v115 = vpop.f32.mrf.mxu0
  %v116 = vadd.f32 0.0, %v115
  %v117 = vpop.f32.mrf.mxu0
  %118 = vdwg.mxu0
  %v119 = vadd.f32 %v33, %v113
  %v120 = vadd.f32 %v34, %v116
  %121 = vst [vmem:[#allocation2] sm:$0xff] %v119
  %122 = vst [vmem:[#allocation2 + $0x8] sm:$0xff] %v120
  // Predicated region
  $region34: #{_lambda_.3} parent=0 // pred_check
    %p123 = pneg %p27
  $region35: #{_lambda_.3} parent=0 // pred_check_branch
    %125 = sbr.rel (%p123) target = $region37
  $region36: #{_lambda_.3} parent=0 // pred_region
    %v126 = vld [vmem:[#allocation2] sm:$0xff]
    %v127 = vld [vmem:[#allocation2 + $0x8] sm:$0xff]
    %v128 = vld [vmem:[%s2] sm:$0x1]
    %v130 = vlaneseq
    %v131 = vshrl.u32 %v130, 7
    %v132 = vsub.s32 0, %v131
    %v133 = vrot.slane %v128, %v132
    %v135 = vadd.f32 %v126, %v133
    %v136 = vadd.f32 %v127, %v133
    %v137 = vmax.f32 %v135, 0.0
    %v138 = vmax.f32 %v136, 0.0
    %v139 = vpack.c.bf16 %v138, %v137
    %v140 = vld [vmem:[%s3] sm:$0xf]
    %v141 = vld [vmem:[%s3 + $0x4] sm:$0xf]
    %v142 = vld [vmem:[%s3 + $0x8] sm:$0xf]
    %v143 = vld [vmem:[%s3 + $0xc] sm:$0xf]
    %v144 = vld [vmem:[%s3 + $0x10] sm:$0xf]
    %v145 = vld [vmem:[%s3 + $0x14] sm:$0xf]
    %v146 = vld [vmem:[%s3 + $0x18] sm:$0xf]
    %v147 = vld [vmem:[%s3 + $0x1c] sm:$0xf]
    %v148 = vld [vmem:[%s3 + $0x20] sm:$0xf]
    %v149 = vld [vmem:[%s3 + $0x24] sm:$0xf]
    %v150 = vld [vmem:[%s3 + $0x28] sm:$0xf]
    %v151 = vld [vmem:[%s3 + $0x2c] sm:$0xf]
    %v152 = vld [vmem:[%s3 + $0x30] sm:$0xf]
    %v153 = vld [vmem:[%s3 + $0x34] sm:$0xf]
    %v154 = vld [vmem:[%s3 + $0x38] sm:$0xf]
    %v155 = vld [vmem:[%s3 + $0x3c] sm:$0xf]
    %v156 = vld [vmem:[%s4] sm:$0x1]
    %v158 = vlaneseq
    %v159 = vshrl.u32 %v158, 7
    %v160 = vsub.s32 0, %v159
    %v161 = vrot.slane %v156, %v160
    %v179 = vunpack.c.l.b16 %v140
    %v180 = vunpack.c.l.b16 %v141
    %v181 = vunpack.c.l.b16 %v142
    %v182 = vunpack.c.l.b16 %v143
    %v183 = vunpack.c.l.b16 %v144
    %v184 = vunpack.c.l.b16 %v145
    %v185 = vunpack.c.l.b16 %v146
    %v186 = vunpack.c.l.b16 %v147
    %v187 = vunpack.c.l.b16 %v148
    %v188 = vunpack.c.l.b16 %v149
    %v189 = vunpack.c.l.b16 %v150
    %v190 = vunpack.c.l.b16 %v151
    %v191 = vunpack.c.l.b16 %v152
    %v192 = vunpack.c.l.b16 %v153
    %v193 = vunpack.c.l.b16 %v154
    %v194 = vunpack.c.l.b16 %v155
    %v195 = vpack.c.b16 %v180, %v179
    %v196 = vpack.c.b16 %v182, %v181
    %v197 = vpack.c.b16 %v184, %v183
    %v198 = vpack.c.b16 %v186, %v185
    %v199 = vpack.c.b16 %v188, %v187
    %v200 = vpack.c.b16 %v190, %v189
    %v201 = vpack.c.b16 %v192, %v191
    %v202 = vpack.c.b16 %v194, %v193
    %211 = vmatprep.subr.bf16.mxu0 0
    %212 = vmatpush1.bf16.msra.mxu0 %v202
    %213 = vmatprep.subr.bf16.mxu0 0
    %214 = vmatpush1.bf16.msra.mxu0 %v201
    %215 = vmatprep.subr.bf16.mxu0 0
    %216 = vmatpush1.bf16.msra.mxu0 %v200
    %217 = vmatprep.subr.bf16.mxu0 0
    %218 = vmatpush1.bf16.msra.mxu0 %v199
    %219 = vmatprep.subr.bf16.mxu0 0
    %220 = vmatpush1.bf16.msra.mxu0 %v198
    %221 = vmatprep.subr.bf16.mxu0 0
    %222 = vmatpush1.bf16.msra.mxu0 %v197
    %223 = vmatprep.subr.bf16.mxu0 0
    %224 = vmatpush1.bf16.msra.mxu0 %v196
    %225 = vmatprep.subr.bf16.mxu0 0
    %226 = vmatpush1.bf16.msra.mxu0 %v195
    %227 = vmatprep.subr.bf16.mxu0 0
    %228 = vmatpush2.bf16.msra.mxu0 0
    %229 = vmatprep.subr.bf16.mxu0 0
    %230 = vmatpush2.bf16.msra.mxu0 0
    %231 = vmatprep.subr.bf16.mxu0 0
    %232 = vmatpush2.bf16.msra.mxu0 0
    %233 = vmatprep.subr.bf16.mxu0 0
    %234 = vmatpush2.bf16.msra.mxu0 0
    %235 = vmatprep.subr.bf16.mxu0 0
    %236 = vmatpush2.bf16.msra.mxu0 0
    %237 = vmatprep.subr.bf16.mxu0 0
    %238 = vmatpush2.bf16.msra.mxu0 0
    %239 = vmatprep.subr.bf16.mxu0 0
    %240 = vmatpush2.bf16.msra.mxu0 0
    %241 = vmatprep.subr.bf16.mxu0 0
    %242 = vmatpush2.bf16.msra.mxu0 0
    %243 = vmatprep.mubr.bf16.mxu0 0
    %244 = vmatmul.mubr.bf16.gmra.mxu0 %v139
    %v245 = vpop.f32.mrf.mxu0
    %v246 = vadd.f32 %v161, %v245
    %v247 = vpop.f32.mrf.mxu0
    %v248 = vpop.f32.mrf.mxu0
    %v249 = vadd.f32 %v161, %v248
    %v250 = vpop.f32.mrf.mxu0
    %251 = vdwg.mxu0
    %v252 = vmax.f32 %v246, 0.0
    %v253 = vmax.f32 %v249, 0.0
    %v254 = vld [vmem:[%s5] sm:$0xff]
    %v255 = vld [vmem:[%s5 + $0x8] sm:$0xff]
    %v256 = vld [vmem:[%s5 + $0x10] sm:$0xff]
    %v257 = vld [vmem:[%s5 + $0x18] sm:$0xff]
    %v258 = vld [vmem:[%s5 + $0x20] sm:$0xff]
    %v259 = vld [vmem:[%s5 + $0x28] sm:$0xff]
    %v260 = vld [vmem:[%s5 + $0x30] sm:$0xff]
    %v261 = vld [vmem:[%s5 + $0x38] sm:$0xff]
    %v262 = vld [vmem:[%s5 + $0x40] sm:$0xff]
    %v263 = vld [vmem:[%s5 + $0x48] sm:$0xff]
    %v264 = vld [vmem:[%s5 + $0x50] sm:$0xff]
    %v265 = vld [vmem:[%s5 + $0x58] sm:$0xff]
    %v266 = vld [vmem:[%s5 + $0x60] sm:$0xff]
    %v267 = vld [vmem:[%s5 + $0x68] sm:$0xff]
    %v268 = vld [vmem:[%s5 + $0x70] sm:$0xff]
    %v269 = vld [vmem:[%s5 + $0x78] sm:$0xff]
    %v270 = vld [vmem:[%s6] sm:$0x1]
    %v272 = vlaneseq
    %v273 = vshrl.u32 %v272, 7
    %v274 = vsub.s32 0, %v273
    %v275 = vrot.slane %v270, %v274
    %277 = vmatprep.subr.mxu0 0.0
    %278 = vmatpush1.msra.mxu0 %v269
    %279 = vmatprep.subr.mxu0 0.0
    %280 = vmatpush1.msra.mxu0 %v268
    %281 = vmatprep.subr.mxu0 0.0
    %282 = vmatpush1.msra.mxu0 %v267
    %283 = vmatprep.subr.mxu0 0.0
    %284 = vmatpush1.msra.mxu0 %v266
    %285 = vmatprep.subr.mxu0 0.0
    %286 = vmatpush1.msra.mxu0 %v265
    %287 = vmatprep.subr.mxu0 0.0
    %288 = vmatpush1.msra.mxu0 %v264
    %289 = vmatprep.subr.mxu0 0.0
    %290 = vmatpush1.msra.mxu0 %v263
    %291 = vmatprep.subr.mxu0 0.0
    %292 = vmatpush1.msra.mxu0 %v262
    %293 = vmatprep.subr.mxu0 0.0
    %294 = vmatpush1.msra.mxu0 %v261
    %295 = vmatprep.subr.mxu0 0.0
    %296 = vmatpush1.msra.mxu0 %v260
    %297 = vmatprep.subr.mxu0 0.0
    %298 = vmatpush1.msra.mxu0 %v259
    %299 = vmatprep.subr.mxu0 0.0
    %300 = vmatpush1.msra.mxu0 %v258
    %301 = vmatprep.subr.mxu0 0.0
    %302 = vmatpush1.msra.mxu0 %v257
    %303 = vmatprep.subr.mxu0 0.0
    %304 = vmatpush1.msra.mxu0 %v256
    %305 = vmatprep.subr.mxu0 0.0
    %306 = vmatpush1.msra.mxu0 %v255
    %307 = vmatprep.subr.mxu0 0.0
    %308 = vmatpush1.msra.mxu0 %v254
    %309 = vmatprep.subr.mxu0 0.0
    %310 = vmatpush2.msra.mxu0 0.0
    %311 = vmatprep.subr.mxu0 0.0
    %312 = vmatpush2.msra.mxu0 0.0
    %313 = vmatprep.subr.mxu0 0.0
    %314 = vmatpush2.msra.mxu0 0.0
    %315 = vmatprep.subr.mxu0 0.0
    %316 = vmatpush2.msra.mxu0 0.0
    %317 = vmatprep.subr.mxu0 0.0
    %318 = vmatpush2.msra.mxu0 0.0
    %319 = vmatprep.subr.mxu0 0.0
    %320 = vmatpush2.msra.mxu0 0.0
    %321 = vmatprep.subr.mxu0 0.0
    %322 = vmatpush2.msra.mxu0 0.0
    %323 = vmatprep.subr.mxu0 0.0
    %324 = vmatpush2.msra.mxu0 0.0
    %325 = vmatprep.subr.mxu0 0.0
    %326 = vmatpush2.msra.mxu0 0.0
    %327 = vmatprep.subr.mxu0 0.0
    %328 = vmatpush2.msra.mxu0 0.0
    %329 = vmatprep.subr.mxu0 0.0
    %330 = vmatpush2.msra.mxu0 0.0
    %331 = vmatprep.subr.mxu0 0.0
    %332 = vmatpush2.msra.mxu0 0.0
    %333 = vmatprep.subr.mxu0 0.0
    %334 = vmatpush2.msra.mxu0 0.0
    %335 = vmatprep.subr.mxu0 0.0
    %336 = vmatpush2.msra.mxu0 0.0
    %337 = vmatprep.subr.mxu0 0.0
    %338 = vmatpush2.msra.mxu0 0.0
    %339 = vmatprep.subr.mxu0 0.0
    %340 = vmatpush2.msra.mxu0 0.0
    %341 = vmatprep.mubr.f32.mxu0 0.0
    %342 = vmatmul.mubr.f32.gmra.mxu0 %v252
    %v343 = vpop.f32.mrf.mxu0
    %v344 = vadd.f32 %v275, %v343
    %v345 = vpop.f32.mrf.mxu0
    %346 = vmatprep.mubr.f32.mxu0 0.0
    %347 = vmatmul.mubr.f32.gmra.mxu0 %v253
    %v348 = vpop.f32.mrf.mxu0
    %v349 = vadd.f32 %v275, %v348
    %v350 = vpop.f32.mrf.mxu0
    %351 = vdwg.mxu0
    %352 = vst [vmem:[%s7] sm:$0xff] %v344
    %353 = vst [vmem:[%s7 + $0x8] sm:$0xff] %v349
  $region37: #{_lambda_.3} parent=0 // pred_fallthru
    _
  // Predicated region
  $region38: #{_lambda_.3} parent=0 // pred_check
    _
  $region39: #{_lambda_.3} parent=0 // pred_check_branch
    %355 = sbr.rel (0) target = $region41
  $region40: #{_lambda_.3} parent=0 // pred_region
    _
  $region41: #{_lambda_.3} parent=0 // pred_fallthru
    _
  // Predicated region
  $region42: #{_lambda_.3} parent=0 // pred_check
    _
  $region43: #{_lambda_.3} parent=0 // pred_check_branch
    %357 = sbr.rel (0) target = $region45
  $region44: #{_lambda_.3} parent=0 // pred_region
    _
  $region45: #{_lambda_.3} parent=0 // pred_fallthru
    _

</llo_original>
